<compile_context>
chip_gen: v5e
topology: v5e:2x2
jax: 0.10.0
libtpu: 0.0.40
codegen_flags: <defaults>
</compile_context>

<pallas_src>
import functools

import jax
import jax.numpy as jnp
from jax import lax
from jax.experimental import pallas as pl
from jax.experimental.pallas import tpu as pltpu


def _reduce_lanes(v, lanes):
    """Chunk-wise sum of a (1, W) row into (1, lanes); requires W % lanes == 0.

    Tree-fold along the lane axis using only static, lane-aligned slices
    (no cross-vreg relayout); O(log(W/lanes)) traced adds.
    """
    w = v.shape[-1]
    tail = None
    while w > lanes:
        n = w // lanes
        if n % 2:                                   # odd chunk count: peel last chunk
            last = v[:, (n - 1) * lanes:w]
            tail = last if tail is None else tail + last
            w = (n - 1) * lanes
            v = v[:, :w]
        else:                                       # even: fold in half
            half = w // 2
            v = v[:, :half] + v[:, half:w]
            w = half
    return v if tail is None else v + tail


def _dual_focal_kernel(x_ref, t_ref, out_ref, *, gamma, lanes):
    x = x_ref[...].astype(jnp.float32)              # (C, TL) logits, class on sublanes
    t = t_ref[...]                                  # (1, TL) int32 class ids

    # log-softmax over the class (sublane) axis.
    m = jnp.max(x, axis=0, keepdims=True)           # (1, TL)
    z = x - m                                       # (C, TL)
    e = jnp.exp(z)                                  # (C, TL)  -- the only full-tile exp
    s = jnp.sum(e, axis=0, keepdims=True)           # (1, TL)
    inv_s = pl.reciprocal(s)                        # exact 1/s on a (1, TL) row only
    p = e * inv_s                                   # softmax probabilities, no 2nd exp

    # Gather target entries via one-hot (iota over the class axis).
    onehot = lax.broadcasted_iota(jnp.int32, z.shape, 0) == t    # (C, TL)
    z_k = jnp.sum(jnp.where(onehot, z, 0.0), axis=0, keepdims=True)   # (1, TL)
    p_k = jnp.sum(jnp.where(onehot, p, 0.0), axis=0, keepdims=True)   # (1, TL)
    logp_k = z_k - jnp.log(s)                       # (1, TL)

    # p_j: largest probability strictly smaller than p_k (0 if none) — matches torch.lt.
    p_j = jnp.max(jnp.where(p < p_k, p, 0.0), axis=0, keepdims=True)  # (1, TL)

    base = (1.0 - p_k) + p_j
    if float(gamma).is_integer() and 0.0 <= gamma <= 8.0:
        f_p = jnp.ones_like(base)                   # gamma == 0 -> f_p = 1 (matches x**0)
        for _ in range(int(gamma)):
            f_p = f_p * base                        # integer gamma: multiplies, no pow/EUP
    else:
        f_p = base ** jnp.float32(gamma)
    loss = -(f_p * logp_k)                          # (1, TL)

    # Lane-dense per-tile partial sums (no resident accumulator).
    out_ref[...] = _reduce_lanes(loss, lanes).reshape(1, 1, lanes)


def _pick_spatial_tile(hw, bytes_per_spatial, target_bytes=1 << 20):
    """Largest lane-aligned spatial tile dividing hw with ~target_bytes of logits."""
    if hw % 128 != 0:
        return hw                                   # full extent (allowed by Pallas)
    cap = max(128, (target_bytes // max(1, bytes_per_spatial)) // 128 * 128)
    tl = min(hw, cap)
    while hw % tl != 0:
        tl -= 128
    return tl


def dual_focal_loss_gra(logits, target, *, gamma=0.0, size_average=False,
                        target_tile_bytes=1 << 20):
    """Forward of DualFocalLossGra.

    logits: [N, C, H, W] (or [M, C]); target: integer class ids with N*H*W (or M) elems.
    """
    if logits.ndim > 2:
        n, c = logits.shape[0], logits.shape[1]
        hw = 1
        for d in logits.shape[2:]:
            hw *= d
        x = logits.reshape(n, c, hw)                        # free reshape, no transpose
        t = target.reshape(n, 1, hw).astype(jnp.int32)
    else:
        # [M, C] rows: put the class axis on sublanes (single transpose).
        m_rows, c = logits.shape
        x = logits.T.reshape(1, c, m_rows)
        t = target.reshape(1, 1, m_rows).astype(jnp.int32)
        n, hw = 1, m_rows

    itemsize = jnp.dtype(x.dtype).itemsize
    tl = _pick_spatial_tile(hw, c * itemsize, target_tile_bytes)
    num_s = hw // tl
    lanes = 128 if tl % 128 == 0 else tl

    kernel = functools.partial(_dual_focal_kernel, gamma=float(gamma), lanes=lanes)

    partials = pl.pallas_call(
        kernel,
        out_shape=jax.ShapeDtypeStruct((n, num_s, lanes), jnp.float32),
        grid=(n, num_s),
        in_specs=[
            # logits: class axis on sublanes (== full C), spatial tile on lanes.
            pl.BlockSpec((None, c, tl), lambda i, s: (i, 0, s)),
            # targets: lane-dense int32 row.
            pl.BlockSpec((None, 1, tl), lambda i, s: (i, 0, s)),
        ],
        out_specs=pl.BlockSpec((1, 1, lanes), lambda i, s: (i, s, 0)),
        compiler_params=pltpu.CompilerParams(
            dimension_semantics=("parallel", "parallel"),
            vmem_limit_bytes=32 * 1024 * 1024,
        ),
    )(x, t)

    total = jnp.sum(partials)                       # tiny final reduction in JAX
    if size_average:
        return total / jnp.float32(n * hw)
    return total


def _reference(logits, target, gamma=0.0, size_average=False):
    """Pure-JAX reference mirroring the PyTorch forward."""
    if logits.ndim > 2:
        n, c = logits.shape[0], logits.shape[1]
        x = logits.reshape(n, c, -1).transpose(0, 2, 1).reshape(-1, c)
    else:
        x = logits
    t = target.reshape(-1).astype(jnp.int32)
    logp = jax.nn.log_softmax(x.astype(jnp.float32), axis=-1)
    p = jnp.exp(logp)
    logp_k = jnp.take_along_axis(logp, t[:, None], axis=1)[:, 0]
    p_k = jnp.exp(logp_k)
    masked = jnp.where(p < p_k[:, None], p, 0.0)
    p_j = jnp.max(masked, axis=-1)
    f_p = (1.0 - p_k + p_j) ** float(gamma)
    loss = -f_p * logp_k
    return jnp.mean(loss) if size_average else jnp.sum(loss)


if __name__ == "__main__":
    key = jax.random.PRNGKey(0)
    k1, k2 = jax.random.split(key)

    N, C, H, W = 2, 4, 16, 16          # M = N*H*W = 512 samples
    GAMMA = 2.0
    logits = jax.random.normal(k1, (N, C, H, W), dtype=jnp.float32)
    target = jax.random.randint(k2, (N, H, W), 0, C, dtype=jnp.int32)

    out = dual_focal_loss_gra(logits, target, gamma=GAMMA, size_average=False)
    out = jax.block_until_ready(out)
    ref = _reference(logits, target, gamma=GAMMA, size_average=False)
    assert jnp.allclose(out, ref, rtol=1e-4, atol=1e-3), (out, ref)

    out2 = dual_focal_loss_gra(logits, target, gamma=0.0, size_average=True)
    out2 = jax.block_until_ready(out2)
    ref2 = _reference(logits, target, gamma=0.0, size_average=True)
    assert jnp.allclose(out2, ref2, rtol=1e-4, atol=1e-3), (out2, ref2)

    print("KERNEL_OK")
</pallas_src>

<mosaic_0001>
module attributes {stable_mosaic.version = 11 : i64} {
  func.func @_dual_focal_kernel(%arg0: i32, %arg1: i32, %arg2: memref<1x4x256xf32, #tpu.memory_space<vmem>>, %arg3: memref<1x1x256xi32, #tpu.memory_space<vmem>>, %arg4: memref<1x1x128xf32, #tpu.memory_space<vmem>>) attributes {dimension_semantics = [#tpu.dimension_semantics<parallel>, #tpu.dimension_semantics<parallel>], iteration_bounds = array<i64: 2, 1>, scalar_prefetch = 0 : i64, scratch_operands = 0 : i64, tpu.core_type = #tpu.core_type<tc>, window_params = [{transform_indices = @transform_0, window_bounds = array<i64: 1, 4, 256>}, {transform_indices = @transform_1, window_bounds = array<i64: 1, 1, 256>}, {transform_indices = @transform_2, window_bounds = array<i64: 1, 1, 128>}]} {
    %c0 = arith.constant 0 : index
    %c0_0 = arith.constant 0 : index
    %c0_1 = arith.constant 0 : index
    %0 = vector.load %arg2[%c0, %c0_0, %c0_1] : memref<1x4x256xf32, #tpu.memory_space<vmem>>, vector<1x4x256xf32>
    %1 = vector.shape_cast %0 : vector<1x4x256xf32> to vector<4x256xf32>
    %c0_2 = arith.constant 0 : index
    %c0_3 = arith.constant 0 : index
    %c0_4 = arith.constant 0 : index
    %2 = vector.load %arg3[%c0_2, %c0_3, %c0_4] : memref<1x1x256xi32, #tpu.memory_space<vmem>>, vector<1x1x256xi32>
    %3 = vector.shape_cast %2 : vector<1x1x256xi32> to vector<1x256xi32>
    %cst = arith.constant dense<0xFF800000> : vector<256xf32>
    %4 = vector.multi_reduction <maximumf>, %1, %cst [0] : vector<4x256xf32> to vector<256xf32>
    %5 = vector.shape_cast %4 : vector<256xf32> to vector<1x256xf32>
    %6 = vector.broadcast %5 : vector<1x256xf32> to vector<4x256xf32>
    %7 = arith.subf %1, %6 : vector<4x256xf32>
    %8 = math.exp %7 : vector<4x256xf32>
    %cst_5 = arith.constant dense<0.000000e+00> : vector<256xf32>
    %9 = vector.multi_reduction <add>, %8, %cst_5 [0] : vector<4x256xf32> to vector<256xf32>
    %10 = vector.shape_cast %9 : vector<256xf32> to vector<1x256xf32>
    %11 = tpu.reciprocal %10 : vector<1x256xf32> -> vector<1x256xf32>
    %12 = vector.broadcast %11 : vector<1x256xf32> to vector<4x256xf32>
    %13 = arith.mulf %8, %12 : vector<4x256xf32>
    %14 = tpu.iota {dimensions = array<i32: 0>} : vector<4x256xi32>
    %15 = vector.broadcast %3 : vector<1x256xi32> to vector<4x256xi32>
    %16 = arith.cmpi eq, %14, %15 : vector<4x256xi32>
    %cst_6 = arith.constant 0.000000e+00 : f32
    %17 = vector.broadcast %cst_6 : f32 to vector<4x256xf32>
    %18 = arith.select %16, %7, %17 : vector<4x256xi1>, vector<4x256xf32>
    %cst_7 = arith.constant dense<0.000000e+00> : vector<256xf32>
    %19 = vector.multi_reduction <add>, %18, %cst_7 [0] : vector<4x256xf32> to vector<256xf32>
    %20 = vector.shape_cast %19 : vector<256xf32> to vector<1x256xf32>
    %cst_8 = arith.constant 0.000000e+00 : f32
    %21 = vector.broadcast %cst_8 : f32 to vector<4x256xf32>
    %22 = arith.select %16, %13, %21 : vector<4x256xi1>, vector<4x256xf32>
    %cst_9 = arith.constant dense<0.000000e+00> : vector<256xf32>
    %23 = vector.multi_reduction <add>, %22, %cst_9 [0] : vector<4x256xf32> to vector<256xf32>
    %24 = vector.shape_cast %23 : vector<256xf32> to vector<1x256xf32>
    %25 = math.log %10 : vector<1x256xf32>
    %26 = arith.subf %20, %25 : vector<1x256xf32>
    %27 = vector.broadcast %24 : vector<1x256xf32> to vector<4x256xf32>
    %28 = arith.cmpf olt, %13, %27 : vector<4x256xf32>
    %cst_10 = arith.constant 0.000000e+00 : f32
    %29 = vector.broadcast %cst_10 : f32 to vector<4x256xf32>
    %30 = arith.select %28, %13, %29 : vector<4x256xi1>, vector<4x256xf32>
    %cst_11 = arith.constant dense<0xFF800000> : vector<256xf32>
    %31 = vector.multi_reduction <maximumf>, %30, %cst_11 [0] : vector<4x256xf32> to vector<256xf32>
    %32 = vector.shape_cast %31 : vector<256xf32> to vector<1x256xf32>
    %cst_12 = arith.constant 1.000000e+00 : f32
    %33 = vector.broadcast %cst_12 : f32 to vector<1x256xf32>
    %34 = arith.subf %33, %24 : vector<1x256xf32>
    %35 = arith.addf %34, %32 : vector<1x256xf32>
    %cst_13 = arith.constant 1.000000e+00 : f32
    %36 = vector.broadcast %cst_13 : f32 to vector<1x256xf32>
    %37 = arith.mulf %36, %35 : vector<1x256xf32>
    %38 = arith.mulf %37, %35 : vector<1x256xf32>
    %39 = arith.mulf %38, %26 : vector<1x256xf32>
    %cst_14 = arith.constant 0.000000e+00 : f32
    %40 = vector.broadcast %cst_14 : f32 to vector<1x256xf32>
    %41 = arith.subf %40, %39 : vector<1x256xf32>
    %42 = vector.extract_strided_slice %41 {offsets = [0, 0], sizes = [1, 128], strides = [1, 1]} : vector<1x256xf32> to vector<1x128xf32>
    %43 = vector.extract_strided_slice %41 {offsets = [0, 128], sizes = [1, 128], strides = [1, 1]} : vector<1x256xf32> to vector<1x128xf32>
    %44 = arith.addf %42, %43 : vector<1x128xf32>
    %45 = vector.shape_cast %44 : vector<1x128xf32> to vector<1x1x128xf32>
    %c0_15 = arith.constant 0 : index
    %c0_16 = arith.constant 0 : index
    %c0_17 = arith.constant 0 : index
    %46 = vector.load %arg4[%c0_15, %c0_16, %c0_17] : memref<1x1x128xf32, #tpu.memory_space<vmem>>, vector<1x1x128xf32>
    tpu.vector_store %arg4[%c0_15, %c0_16, %c0_17], %45 {strides = array<i32>} : memref<1x1x128xf32, #tpu.memory_space<vmem>>, vector<1x1x128xf32>,
    return
  }
  func.func @transform_0(%arg0: i32, %arg1: i32) -> (i32, i32, i32) {
    %c0_i32 = arith.constant 0 : i32
    %c0_i32_0 = arith.constant 0 : i32
    return %arg0, %c0_i32, %arg1 : i32, i32, i32
  }
  func.func @transform_1(%arg0: i32, %arg1: i32) -> (i32, i32, i32) {
    %c0_i32 = arith.constant 0 : i32
    %c0_i32_0 = arith.constant 0 : i32
    return %arg0, %c0_i32, %arg1 : i32, i32, i32
  }
  func.func @transform_2(%arg0: i32, %arg1: i32) -> (i32, i32, i32) {
    %c0_i32 = arith.constant 0 : i32
    %c0_i32_0 = arith.constant 0 : i32
    return %arg0, %arg1, %c0_i32 : i32, i32, i32
  }
}

</mosaic_0001>

<llo_original>
// kernel: tpu_custom_call.1
$region0: #{tpu_custom_call.1}
  #allocation0 [shape = 'u32[]', space=smem, size = 0x4, offset = 0x4, fixed_abs, tag = 'smem constant byte address 0x4 - core index']
  #allocation1 [shape = 'u32[72,128]{1,0:T(1,128)}', space=vmem, size = 0x9000, scoped, tag = 'internal scratch']
  %s0 = inlined_call_operand.hbm [shape: f32[2,4,256], index: 0, kind: input, shape index: {}]
  %s1 = inlined_call_operand.hbm [shape: s32[2,1,256], index: 1, kind: input, shape index: {}]
  %s2 = inlined_call_operand.hbm [shape: f32[2,1,128], index: 2, kind: output, shape index: {}]
  %s3 = sld [smem:[#allocation0]]
  $region49: #{tpu_custom_call.1} parent=0
    _
  %s5 = ssub.s32 1, %s3
  %s6 = scalar_select 0, %s5, %s3
  $region1: #{tpu_custom_call.1} parent=0
    #allocation2 [shape = 'u8[8192]{0}', space=vmem, size = 0x2000, scoped, tag = 'input window, operand 0']
    #allocation3 [shape = 's32[2]{0}', space=sflag, size = 0x8, scoped, tag = 'scoped memory for tpu_custom_call.1']
    #allocation4 [shape = 's32[2]{0}', space=sflag, size = 0x8, scoped, tag = 'scoped memory for tpu_custom_call.1']
    #allocation5 [shape = 'u8[2048]{0}', space=vmem, size = 0x800, scoped, tag = 'input window, operand 1']
    #allocation6 [shape = 's32[2]{0}', space=sflag, size = 0x8, scoped, tag = 'scoped memory for tpu_custom_call.1']
    #allocation7 [shape = 'u8[1024]{0}', space=vmem, size = 0x400, scoped, tag = 'output window, operand 0']
    %7 = vsyncpa [#allocation3], 0
    %s8 = scalar_lea.sflag [#allocation3], 1
    %9 = vsyncpa %s8, 0
    %10 = vsyncpa [#allocation6], 0
    %s11 = scalar_lea.sflag [#allocation6], 1
    %12 = vsyncpa %s11, 0
    %13 = vsyncpa [#allocation4], 0
    %s14 = scalar_lea.sflag [#allocation4], 1
    %15 = vsyncpa %s14, 0
    loop: start=0, step=1, limit=4
    $region2: #{tpu_custom_call.1} parent=1 // loop_pre_header
      _
    $region3: #{tpu_custom_call.1} parent=1 // loop_header
      %s17 = sphi 0, %s21
      %p18 = scmp.ge.s32.totalorder %s17, 4
      %s24 = sphi 0, %s36
      %s25 = sphi 0, %s32
      %s26 = sphi 0, %s24
      %s27 = sphi 0, %s25
      %s28 = sphi 0, %s26
      %s29 = sphi 0, %s27
      %s41 = sphi 0, %s43
      %s44 = sphi 0, %s41
      %s45 = sphi 0, %s44
      %s61 = sphi 0, %s45
      %s69 = sphi 0, %s71
      %s72 = sphi 0, %s69
      %s73 = sphi 0, %s72
      %s89 = sphi 0, %s73
      %s97 = sphi 0, %s99
      %s100 = sphi 0, %s97
      %s101 = sphi 0, %s100
      %s117 = sphi 0, %s101
    $region4: #{tpu_custom_call.1} parent=1 // loop_header_branch
      %20 = sbr.rel (%p18) target = $region8
    $region5: #{tpu_custom_call.1} parent=1 // loop_body
      %s22 = ssub.s32 %s17, 1
      %s23 = ssub.s32 %s17, 2
      %s30 = sadd.s32 1, %s25
      %p31 = scmp.ge.s32.totalorder %s30, 1
      %s32 = scalar_select %p31, 0, %s30
      %s33 = sadd.s32 1, %s24
      %s34 = scalar_select %p31, %s33, %s24
      %p35 = scmp.ge.s32.totalorder %s34, 2
      %s36 = scalar_select %p35, 0, %s34
      %s37 = ssub.s32 %s24, %s36
      %s38 = ssub.s32 %s25, %s32
      %s39 = sor.u32 %s37, %s38
      %p40 = scmp.eq.s32.totalorder %s39, 0
      %s42 = sadd.s32 %s41, 1
      %s43 = scalar_select %p40, %s41, %s42
      %p46 = pneg %p40
      %p47 = scmp.eq.s32.totalorder %s17, 1
      %p48 = por %p46, %p47
      %p49 = scmp.ne.s32.totalorder %s41, %s44
      %p50 = scmp.eq.s32.totalorder %s17, 0
      %p51 = por %p49, %p50
      %p52 = scmp.ne.s32.totalorder %s41, %s44
      %p53 = scmp.eq.s32.totalorder %s22, 1
      %p54 = por %p52, %p53
      %p55 = scmp.ne.s32.totalorder %s44, %s45
      %p56 = scmp.eq.s32.totalorder %s22, 0
      %p57 = por %p55, %p56
      %p58 = scmp.ne.s32.totalorder %s44, %s45
      %p59 = scmp.eq.s32.totalorder %s23, 1
      %p60 = por %p58, %p59
      %p62 = scmp.ne.s32.totalorder %s45, %s61
      %p63 = scmp.eq.s32.totalorder %s23, 0
      %p64 = por %p62, %p63
      %s65 = ssub.s32 %s24, %s36
      %s66 = ssub.s32 %s25, %s32
      %s67 = sor.u32 %s65, %s66
      %p68 = scmp.eq.s32.totalorder %s67, 0
      %s70 = sadd.s32 %s69, 1
      %s71 = scalar_select %p68, %s69, %s70
      %p74 = pneg %p68
      %p75 = scmp.eq.s32.totalorder %s17, 1
      %p76 = por %p74, %p75
      %p77 = scmp.ne.s32.totalorder %s69, %s72
      %p78 = scmp.eq.s32.totalorder %s17, 0
      %p79 = por %p77, %p78
      %p80 = scmp.ne.s32.totalorder %s69, %s72
      %p81 = scmp.eq.s32.totalorder %s22, 1
      %p82 = por %p80, %p81
      %p83 = scmp.ne.s32.totalorder %s72, %s73
      %p84 = scmp.eq.s32.totalorder %s22, 0
      %p85 = por %p83, %p84
      %p86 = scmp.ne.s32.totalorder %s72, %s73
      %p87 = scmp.eq.s32.totalorder %s23, 1
      %p88 = por %p86, %p87
      %p90 = scmp.ne.s32.totalorder %s73, %s89
      %p91 = scmp.eq.s32.totalorder %s23, 0
      %p92 = por %p90, %p91
      %s93 = ssub.s32 %s24, %s36
      %s94 = ssub.s32 %s25, %s32
      %s95 = sor.u32 %s93, %s94
      %p96 = scmp.eq.s32.totalorder %s95, 0
      %s98 = sadd.s32 %s97, 1
      %s99 = scalar_select %p96, %s97, %s98
      %p102 = pneg %p96
      %p103 = scmp.eq.s32.totalorder %s17, 1
      %p104 = por %p102, %p103
      %p105 = scmp.ne.s32.totalorder %s97, %s100
      %p106 = scmp.eq.s32.totalorder %s17, 0
      %p107 = por %p105, %p106
      %p108 = scmp.ne.s32.totalorder %s97, %s100
      %p109 = scmp.eq.s32.totalorder %s22, 1
      %p110 = por %p108, %p109
      %p111 = scmp.ne.s32.totalorder %s100, %s101
      %p112 = scmp.eq.s32.totalorder %s22, 0
      %p113 = por %p111, %p112
      %p114 = scmp.ne.s32.totalorder %s100, %s101
      %p115 = scmp.eq.s32.totalorder %s23, 1
      %p116 = por %p114, %p115
      %p118 = scmp.ne.s32.totalorder %s101, %s117
      %p119 = scmp.eq.s32.totalorder %s23, 0
      %p120 = por %p118, %p119
      %p121 = scmp.le.s32.totalorder 1, %s17
      %p122 = scmp.lt.s32.totalorder %s17, 3
      %p123 = pnand %p121, %p122
      %p124 = pneg %p123
      // Predicated region
      $region9: #{tpu_custom_call.1} parent=5 // pred_check
        _
      $region10: #{tpu_custom_call.1} parent=5 // pred_check_branch
        %126 = sbr.rel (%p123) target = $region12
      $region11: #{tpu_custom_call.1} parent=5 // pred_region
        %s127 = ssub.s32 %s17, 1
      $region12: #{tpu_custom_call.1} parent=5 // pred_fallthru
        _
      %p128 = scmp.lt.s32.totalorder %s17, 2
      // Predicated region
      $region13: #{tpu_custom_call.1} parent=5 // pred_check
        %p129 = pneg %p128
      $region14: #{tpu_custom_call.1} parent=5 // pred_check_branch
        %131 = sbr.rel (%p129) target = $region16
      $region15: #{tpu_custom_call.1} parent=5 // pred_region
        // Predicated region
        $region17: #{tpu_custom_call.1} parent=15 // pred_check
          %p132 = pneg %p51
        $region18: #{tpu_custom_call.1} parent=15 // pred_check_branch
          %134 = sbr.rel (%p132) target = $region20
        $region19: #{tpu_custom_call.1} parent=15 // pred_region
          %s135 = sand.u32 %s41, 1
          %s136 = scalar_lea.sflag [#allocation3], %s135
          %s137 = sand.u32 %s41, 1
          %s138 = smul.addr %s137, 8
          %s139 = scalar_lea.vmem [#allocation2], %s138
          %s140 = smul.u32 2, %s25
          %142 = vsyncadd %s136, 0
          %s143 = smul.addr %s24, 2
          %s144 = sadd.s32 %s140, %s143
          %s145 = smul.addr %s144, 4
          %s146 = scalar_lea.hbm %s0, %s145
          %s148 = sshll.u32 %s146, 4
          %s149 = int_to_ptr.hbm [resolvable:$true] %s148
          %s150 = sshll.u32 %s139, 4
          %s151 = int_to_ptr.vmem [resolvable:$true] %s150
          %153 = dma.hbm_to_vmem [thread:$0]  %s149, 128, %s151, %s136
        $region20: #{tpu_custom_call.1} parent=15 // pred_fallthru
          _
        // Predicated region
        $region21: #{tpu_custom_call.1} parent=15 // pred_check
          %p154 = pneg %p79
        $region22: #{tpu_custom_call.1} parent=15 // pred_check_branch
          %156 = sbr.rel (%p154) target = $region24
        $region23: #{tpu_custom_call.1} parent=15 // pred_region
          %s157 = sand.u32 %s69, 1
          %s158 = scalar_lea.sflag [#allocation6], %s157
          %s159 = sand.u32 %s69, 1
          %s160 = smul.addr %s159, 2
          %s161 = scalar_lea.vmem [#allocation5], %s160
          %s162 = smul.u32 2, %s25
          %164 = vsyncadd %s158, 0
          %s165 = smul.addr %s24, 2
          %s166 = sadd.s32 %s162, %s165
          %s167 = scalar_lea.hbm %s1, %s166
          %s169 = sshll.u32 %s167, 4
          %s170 = int_to_ptr.hbm [resolvable:$true] %s169
          %s171 = sshll.u32 %s161, 4
          %s172 = int_to_ptr.vmem [resolvable:$true] %s171
          %174 = dma.hbm_to_vmem [thread:$0]  %s170, 32, %s172, %s158
        $region24: #{tpu_custom_call.1} parent=15 // pred_fallthru
          _
      $region16: #{tpu_custom_call.1} parent=5 // pred_fallthru
        _
      %p175 = scmp.le.s32.totalorder 1, %s17
      %p176 = scmp.lt.s32.totalorder %s17, 3
      %p177 = pnand %p175, %p176
      %p178 = pneg %p177
      // Predicated region
      $region25: #{tpu_custom_call.1} parent=5 // pred_check
        _
      $region26: #{tpu_custom_call.1} parent=5 // pred_check_branch
        %180 = sbr.rel (%p177) target = $region28
      $region27: #{tpu_custom_call.1} parent=5 // pred_region
        %s181 = ssub.s32 %s17, 1
        %s182 = sand.u32 %s44, 1
        %s183 = scalar_lea.sflag [#allocation3], %s182
        %s184 = sand.u32 %s44, 1
        %s185 = smul.addr %s184, 8
        %s186 = scalar_lea.vmem [#allocation2], %s185
        // Predicated region
        $region29: #{tpu_custom_call.1} parent=27 // pred_check
          %p187 = pneg %p57
        $region30: #{tpu_custom_call.1} parent=27 // pred_check_branch
          %189 = sbr.rel (%p187) target = $region32
        $region31: #{tpu_custom_call.1} parent=27 // pred_region
          %191 = dma.done %s183, 128
        $region32: #{tpu_custom_call.1} parent=27 // pred_fallthru
          _
        %s192 = sand.u32 %s72, 1
        %s193 = scalar_lea.sflag [#allocation6], %s192
        %s194 = sand.u32 %s72, 1
        %s195 = smul.addr %s194, 2
        %s196 = scalar_lea.vmem [#allocation5], %s195
        // Predicated region
        $region33: #{tpu_custom_call.1} parent=27 // pred_check
          %p197 = pneg %p85
        $region34: #{tpu_custom_call.1} parent=27 // pred_check_branch
          %199 = sbr.rel (%p197) target = $region36
        $region35: #{tpu_custom_call.1} parent=27 // pred_region
          %201 = dma.done %s193, 32
        $region36: #{tpu_custom_call.1} parent=27 // pred_fallthru
          _
        %s202 = sand.u32 %s44, 1
        %s203 = scalar_lea.sflag [#allocation3], %s202
        %s204 = sand.u32 %s44, 1
        %s205 = smul.addr %s204, 8
        %s206 = scalar_lea.vmem [#allocation2], %s205
        %p207 = pneg %p57
        %p208 = pneg %p54
        %s209 = sand.u32 %s72, 1
        %s210 = scalar_lea.sflag [#allocation6], %s209
        %s211 = sand.u32 %s72, 1
        %s212 = smul.addr %s211, 2
        %s213 = scalar_lea.vmem [#allocation5], %s212
        %p214 = pneg %p85
        %p215 = pneg %p82
        %p216 = pneg %p113
        %p217 = pneg %p110
        %s218 = sand.u32 %s100, 1
        %s219 = scalar_lea.sflag [#allocation4], %s218
        %s220 = sand.u32 %s100, 1
        %s221 = scalar_lea.vmem [#allocation7], %s220
        %s222 = smul.u32 2, %s27
        %s223 = smul.u32 2, %s27
        %v224 = vld [vmem:[%s186] sm:$0xff]
        %v225 = vld [vmem:[%s196] sm:$0x3]
        %227 = vst [vmem:[#allocation1] ss:$2 sm:$0xff] %v224
        %v228 = vld.sshfl [vmem:[#allocation1] sm:$0xff pattern:$0x75316420]
        %v229 = vld.sshfl [vmem:[#allocation1 + $0x8] sm:$0xff pattern:$0x75316420]
        %vm232 = vcmask 1043456
        %v233 = vsel %vm232, %v228, -inf
        %v234 = vrot.slane %v233, 4
        %v235 = vmax.f32 %v233, %v234
        %v236 = vrot.slane %v235, 2
        %v237 = vmax.f32 %v235, %v236
        %v238 = vrot.slane %v237, 1
        %v239 = vmax.f32 %v237, %v238
        %v240 = vsel %vm232, %v229, -inf
        %v241 = vrot.slane %v240, 4
        %v242 = vmax.f32 %v240, %v241
        %v243 = vrot.slane %v242, 2
        %v244 = vmax.f32 %v242, %v243
        %v245 = vrot.slane %v244, 1
        %v246 = vmax.f32 %v244, %v245
        %v249 = vrot.slane %v246, 4
        %v250 = vsel %vm232, %v239, %v249
        %v252 = vsub.f32 %v224, %v250
        %v253 = vmul.f32 %v252, 1.442695
        %v254 = vpow.pop %v253
        %256 = vst [vmem:[#allocation1] ss:$2 sm:$0xff] %v254
        %v257 = vld.sshfl [vmem:[#allocation1] sm:$0xff pattern:$0x75316420]
        %v258 = vld.sshfl [vmem:[#allocation1 + $0x8] sm:$0xff pattern:$0x75316420]
        %v261 = vsel %vm232, %v257, 0.0
        %v262 = vrot.slane %v261, 4
        %v263 = vadd.f32 %v261, %v262
        %v264 = vrot.slane %v263, 2
        %v265 = vadd.f32 %v263, %v264
        %v266 = vrot.slane %v265, 1
        %v267 = vadd.f32 %v265, %v266
        %v268 = vsel %vm232, %v258, 0.0
        %v269 = vrot.slane %v268, 4
        %v270 = vadd.f32 %v268, %v269
        %v271 = vrot.slane %v270, 2
        %v272 = vadd.f32 %v270, %v271
        %v273 = vrot.slane %v272, 1
        %v274 = vadd.f32 %v272, %v273
        %v275 = vrcp.pop %v267
        %v276 = vmul.f32 %v267, %v275
        %v277 = vsub.f32 1.0, %v276
        %v278 = vmul.f32 %v275, %v277
        %v279 = vadd.f32 %v275, %v278
        %vm280 = vweird.f32 %v267
        %vm281 = vweird.f32 %v275
        %vm282 = vmor %vm280, %vm281
        %v283 = vsel %vm282, %v275, %v279
        %v284 = vand.u32 2147483647, %v267
        %vm285 = vcmp.eq.f32.partialorder %v284, 8.507059e+37
        %v286 = vand.u32 %v267, 2147483648
        %v287 = vor.u32 1.1754944e-38, %v286
        %v288 = vsel %vm285, %v287, %v283
        %v289 = vrcp.pop %v274
        %v290 = vmul.f32 %v274, %v289
        %v291 = vsub.f32 1.0, %v290
        %v292 = vmul.f32 %v289, %v291
        %v293 = vadd.f32 %v289, %v292
        %vm294 = vweird.f32 %v274
        %vm295 = vweird.f32 %v289
        %vm296 = vmor %vm294, %vm295
        %v297 = vsel %vm296, %v289, %v293
        %v298 = vand.u32 2147483647, %v274
        %vm299 = vcmp.eq.f32.partialorder %v298, 8.507059e+37
        %v300 = vand.u32 %v274, 2147483648
        %v301 = vor.u32 1.1754944e-38, %v300
        %v302 = vsel %vm299, %v301, %v297
        %v305 = vrot.slane %v302, 4
        %v306 = vsel %vm232, %v288, %v305
        %v308 = vmul.f32 %v254, %v306
        %v309 = vlaneseq
        %v310 = vshrl.u32 %v309, 7
        %v311 = vperm.slane %v225, 0
        %v312 = vperm.slane %v225, 1
        %vm313 = vcmp.eq.s32.totalorder %v310, %v311
        %vm314 = vcmp.eq.s32.totalorder %v310, %v312
        %316 = vst [vmem:[#allocation1] ss:$2 sm:$0xff] %v252
        %v317 = vld.sshfl [vmem:[#allocation1] sm:$0xff pattern:$0x75316420]
        %v318 = vld.sshfl [vmem:[#allocation1 + $0x8] sm:$0xff pattern:$0x75316420]
        %v321 = vsel %vm313, %v317, 0.0
        %v322 = vsel %vm314, %v318, 0.0
        %v323 = vsel %vm232, %v321, 0.0
        %v324 = vrot.slane %v323, 4
        %v325 = vadd.f32 %v323, %v324
        %v326 = vrot.slane %v325, 2
        %v327 = vadd.f32 %v325, %v326
        %v328 = vrot.slane %v327, 1
        %v329 = vadd.f32 %v327, %v328
        %v330 = vsel %vm232, %v322, 0.0
        %v331 = vrot.slane %v330, 4
        %v332 = vadd.f32 %v330, %v331
        %v333 = vrot.slane %v332, 2
        %v334 = vadd.f32 %v332, %v333
        %v335 = vrot.slane %v334, 1
        %v336 = vadd.f32 %v334, %v335
        %338 = vst [vmem:[#allocation1] ss:$2 sm:$0xff] %v308
        %v339 = vld.sshfl [vmem:[#allocation1] sm:$0xff pattern:$0x75316420]
        %v340 = vld.sshfl [vmem:[#allocation1 + $0x8] sm:$0xff pattern:$0x75316420]
        %v343 = vsel %vm313, %v339, 0.0
        %v344 = vsel %vm314, %v340, 0.0
        %v345 = vsel %vm232, %v343, 0.0
        %v346 = vrot.slane %v345, 4
        %v347 = vadd.f32 %v345, %v346
        %v348 = vrot.slane %v347, 2
        %v349 = vadd.f32 %v347, %v348
        %v350 = vrot.slane %v349, 1
        %v351 = vadd.f32 %v349, %v350
        %v352 = vsel %vm232, %v344, 0.0
        %v353 = vrot.slane %v352, 4
        %v354 = vadd.f32 %v352, %v353
        %v355 = vrot.slane %v354, 2
        %v356 = vadd.f32 %v354, %v355
        %v357 = vrot.slane %v356, 1
        %v358 = vadd.f32 %v356, %v357
        %v359 = vlog2.pop %v267
        %v360 = vmul.f32 %v359, 0.6931472
        %v361 = vlog2.pop %v274
        %v362 = vmul.f32 %v361, 0.6931472
        %v363 = vsub.f32 %v329, %v360
        %v364 = vsub.f32 %v336, %v362
        %v367 = vrot.slane %v358, 4
        %v368 = vsel %vm232, %v351, %v367
        %vm370 = vcmp.lt.f32.partialorder %v308, %v368
        %v371 = vsel %vm370, %v308, 0.0
        %373 = vst [vmem:[#allocation1] ss:$2 sm:$0xff] %v371
        %v374 = vld.sshfl [vmem:[#allocation1] sm:$0xff pattern:$0x75316420]
        %v375 = vld.sshfl [vmem:[#allocation1 + $0x8] sm:$0xff pattern:$0x75316420]
        %v378 = vsel %vm232, %v374, -inf
        %v379 = vrot.slane %v378, 4
        %v380 = vmax.f32 %v378, %v379
        %v381 = vrot.slane %v380, 2
        %v382 = vmax.f32 %v380, %v381
        %v383 = vrot.slane %v382, 1
        %v384 = vmax.f32 %v382, %v383
        %v385 = vsel %vm232, %v375, -inf
        %v386 = vrot.slane %v385, 4
        %v387 = vmax.f32 %v385, %v386
        %v388 = vrot.slane %v387, 2
        %v389 = vmax.f32 %v387, %v388
        %v390 = vrot.slane %v389, 1
        %v391 = vmax.f32 %v389, %v390
        %v392 = vsub.f32 1.0, %v351
        %v393 = vsub.f32 1.0, %v358
        %v394 = vadd.f32 %v392, %v384
        %v395 = vadd.f32 %v393, %v391
        %v396 = vmul.f32 %v394, %v394
        %v397 = vmul.f32 %v395, %v395
        %v398 = vmul.f32 %v396, %v363
        %v399 = vmul.f32 %v397, %v364
        %v400 = vsub.f32 0.0, %v398
        %v401 = vsub.f32 0.0, %v399
        %v402 = vadd.f32 %v400, %v401
        %403 = vst [vmem:[%s221] sm:$0x1] %v402
        %s404 = sand.u32 %s100, 1
        %s405 = scalar_lea.sflag [#allocation4], %s404
        %s406 = sand.u32 %s100, 1
        %s407 = scalar_lea.vmem [#allocation7], %s406
        // Predicated region
        $region37: #{tpu_custom_call.1} parent=27 // pred_check
          %p408 = pneg %p110
        $region38: #{tpu_custom_call.1} parent=27 // pred_check_branch
          %410 = sbr.rel (%p408) target = $region40
        $region39: #{tpu_custom_call.1} parent=27 // pred_region
          %412 = vsyncadd %s405, 0
          %s413 = sadd.s32 %s27, %s26
          %s414 = scalar_lea.hbm %s2, %s413
          %s416 = sshll.u32 %s407, 4
          %s417 = int_to_ptr.vmem [resolvable:$true] %s416
          %s418 = sshll.u32 %s414, 4
          %s419 = int_to_ptr.hbm [resolvable:$true] %s418
          %421 = dma.vmem_to_hbm [thread:$0]  %s417, 16, %s419, %s405
        $region40: #{tpu_custom_call.1} parent=27 // pred_fallthru
          _
      $region28: #{tpu_custom_call.1} parent=5 // pred_fallthru
        _
      %p422 = scmp.le.s32.totalorder 2, %s17
      // Predicated region
      $region41: #{tpu_custom_call.1} parent=5 // pred_check
        %p423 = pneg %p422
      $region42: #{tpu_custom_call.1} parent=5 // pred_check_branch
        %425 = sbr.rel (%p423) target = $region44
      $region43: #{tpu_custom_call.1} parent=5 // pred_region
        %s426 = ssub.s32 %s17, 2
        // Predicated region
        $region45: #{tpu_custom_call.1} parent=43 // pred_check
          %p427 = pneg %p116
        $region46: #{tpu_custom_call.1} parent=43 // pred_check_branch
          %429 = sbr.rel (%p427) target = $region48
        $region47: #{tpu_custom_call.1} parent=43 // pred_region
          %s430 = sand.u32 %s101, 1
          %s431 = scalar_lea.sflag [#allocation4], %s430
          %s432 = sand.u32 %s101, 1
          %s433 = scalar_lea.vmem [#allocation7], %s432
          %435 = dma.done %s431, 16
        $region48: #{tpu_custom_call.1} parent=43 // pred_fallthru
          _
      $region44: #{tpu_custom_call.1} parent=5 // pred_fallthru
        _
    $region6: #{tpu_custom_call.1} parent=1 // loop_footer
      %s21 = sadd.s32 1, %s17
    $region7: #{tpu_custom_call.1} parent=1 // loop_footer_branch
      %16 = sbr.rel target = $region3
    $region8: #{tpu_custom_call.1} parent=1 // loop_exit
      _
    %436 = vsyncpa [#allocation3], 1
    %s437 = scalar_lea.sflag [#allocation3], 1
    %438 = vsyncpa %s437, 1
    %439 = vsyncpa [#allocation6], 1
    %s440 = scalar_lea.sflag [#allocation6], 1
    %441 = vsyncpa %s440, 1
    %442 = vsyncpa [#allocation4], 1
    %s443 = scalar_lea.sflag [#allocation4], 1
    %444 = vsyncpa %s443, 1

</llo_original>
